<compile_context>
chip_gen: v7x
topology: tpu7x:2x2x1
jax: 0.10.0
libtpu: 0.0.40
codegen_flags: <defaults>
</compile_context>

<pallas_src>
import jax
import jax.numpy as jnp
from jax.experimental import pallas as pl
from jax.experimental.pallas import tpu as pltpu

_INV_255 = 1.0 / 255.0      # plain Python float -> trace-time immediate in the kernel
_MAX_TILE_ROWS = 1024       # multiple of 32 (uint8 min tile is (32,128)); small
                            # enough that mid-size inputs give >=2 grid steps
                            # (v7x dual-TC sharding), big enough to hide per-step
                            # pipeline overhead.


def _normalize_kernel(x_ref, o_ref):
    # Elementwise: cast uint8 -> f32 and scale by 1/255 (matches x.float()/255.0
    # to within 1 ulp; constant multiply instead of divide).
    o_ref[...] = x_ref[...].astype(jnp.float32) * _INV_255


def _run_2d(x2d, tile_rows, allow_input_fusion=None):
    rows, lane = x2d.shape
    grid = (pl.cdiv(rows, tile_rows),)
    return pl.pallas_call(
        _normalize_kernel,
        out_shape=jax.ShapeDtypeStruct((rows, lane), jnp.float32),
        grid_spec=pltpu.PrefetchScalarGridSpec(
            num_scalar_prefetch=0,
            grid=grid,
            in_specs=[pl.BlockSpec((tile_rows, lane), lambda i: (i, 0))],
            out_specs=pl.BlockSpec((tile_rows, lane), lambda i: (i, 0)),
        ),
        compiler_params=pltpu.CompilerParams(
            dimension_semantics=("parallel",),
            allow_input_fusion=allow_input_fusion,
        ),
    )(x2d)


def _choose_lane(total):
    # Largest lane-dense last dim (multiple of 128) that divides the element
    # count, so no padding / slicing copies are needed.
    for lane in (512, 256, 128):
        if total % lane == 0:
            return lane
    return None


def wrapped_model_forward(x):
    """Integer tensor -> float32 tensor equal to x.float() / 255.0 (NCHW preserved)."""
    orig_shape = x.shape
    total = x.size

    lane = _choose_lane(total)
    if lane is not None:
        # Pad-free path: reshape is free, ragged last row-block is masked by Pallas.
        rows = total // lane
        tile_rows = rows if rows <= _MAX_TILE_ROWS else _MAX_TILE_ROWS
        x2d = x.reshape(rows, lane)
        out2d = _run_2d(x2d, tile_rows)
        return out2d.reshape(orig_shape)

    # Fallback (element count not a multiple of 128): pad only the sub-128
    # remainder, let XLA fuse the pad into the kernel's input DMA, slice after.
    lane = 128
    pad = lane - (total % lane)
    padded_total = total + pad
    rows = padded_total // lane
    tile_rows = rows if rows <= _MAX_TILE_ROWS else _MAX_TILE_ROWS
    x2d = jnp.pad(x.reshape(-1), (0, pad)).reshape(rows, lane)
    out2d = _run_2d(x2d, tile_rows, allow_input_fusion=[True])
    return out2d.reshape(-1)[:total].reshape(orig_shape)


if __name__ == "__main__":
    key = jax.random.PRNGKey(0)
    # Small NCHW input consistent with an image-style model: batch=2,
    # channels=4, spatial=16x16, uint8 pixel values.
    x = jax.random.randint(key, (2, 4, 16, 16), 0, 256, dtype=jnp.int32).astype(
        jnp.uint8
    )

    out = wrapped_model_forward(x)
    out = jax.block_until_ready(out)

    # Reference: plain JAX semantics of x.float() / 255.0.
    # Multiply-by-1/255 can differ from true division by 1 ulp -> small rtol.
    ref = x.astype(jnp.float32) / 255.0
    assert out.shape == (2, 4, 16, 16)
    assert out.dtype == jnp.float32
    assert jnp.allclose(out, ref, atol=0.0, rtol=1e-6)

    print("KERNEL_OK")
</pallas_src>

<mosaic_0001>
module attributes {stable_mosaic.version = 11 : i64} {
  func.func @_normalize_kernel(%arg0: i32, %arg1: memref<4x512xi8, #tpu.memory_space<vmem>>, %arg2: memref<4x512xf32, #tpu.memory_space<vmem>>) attributes {dimension_semantics = [#tpu.dimension_semantics<parallel>], iteration_bounds = array<i64: 1>, scalar_prefetch = 0 : i64, scratch_operands = 0 : i64, tpu.core_type = #tpu.core_type<tc>, window_params = [{transform_indices = @transform_0, window_bounds = array<i64: 4, 512>}, {transform_indices = @transform_1, window_bounds = array<i64: 4, 512>}]} {
    %c0 = arith.constant 0 : index
    %c0_0 = arith.constant 0 : index
    %0 = vector.load %arg1[%c0, %c0_0] : memref<4x512xi8, #tpu.memory_space<vmem>>, vector<4x512xi8>
    %1 = arith.uitofp %0 : vector<4x512xi8> to vector<4x512xf32>
    %cst = arith.constant 0.00392156886 : f32
    %2 = vector.broadcast %cst : f32 to vector<4x512xf32>
    %3 = arith.mulf %1, %2 : vector<4x512xf32>
    %c0_1 = arith.constant 0 : index
    %c0_2 = arith.constant 0 : index
    %4 = vector.load %arg2[%c0_1, %c0_2] : memref<4x512xf32, #tpu.memory_space<vmem>>, vector<4x512xf32>
    tpu.vector_store %arg2[%c0_1, %c0_2], %3 {strides = array<i32>} : memref<4x512xf32, #tpu.memory_space<vmem>>, vector<4x512xf32>,
    return
  }
  func.func @transform_0(%arg0: i32) -> (i32, i32) {
    %c0_i32 = arith.constant 0 : i32
    %c0_i32_0 = arith.constant 0 : i32
    return %arg0, %c0_i32 : i32, i32
  }
  func.func @transform_1(%arg0: i32) -> (i32, i32) {
    %c0_i32 = arith.constant 0 : i32
    %c0_i32_0 = arith.constant 0 : i32
    return %arg0, %c0_i32 : i32, i32
  }
}

</mosaic_0001>

<llo_original>
// kernel: tpu_custom_call.1
$region0: #{tpu_custom_call.1}
  #allocation0 [shape = 'u32[]', space=smem, size = 0x4, offset = 0x4, fixed_abs, tag = 'smem constant byte address 0x4 - core index']
  #allocation1 [shape = 'u32[144,128]{1,0:T(1,128)}', space=vmem, size = 0x12000, scoped, tag = 'internal scratch']
  %s0 = inlined_call_operand.hbm [shape: u8[4,512], index: 0, kind: input, shape index: {}]
  %s1 = inlined_call_operand.hbm [shape: f32[4,512], index: 1, kind: output, shape index: {}]
  %s2 = sld [smem:[#allocation0]]
  $region18: #{tpu_custom_call.1} parent=0
    _
  %s4 = ssub.s32 1, %s2
  %s5 = scalar_select 0, %s4, %s2
  $region1: #{tpu_custom_call.1} parent=0
    #allocation2 [shape = 'u8[2048]{0}', space=vmem, size = 0x800, scoped, tag = 'input window, operand 0, single buffered']
    #allocation3 [shape = 's32[1]{0}', space=sflag, size = 0x4, scoped, tag = 'scoped memory for tpu_custom_call.1']
    #allocation4 [shape = 's32[1]{0}', space=sflag, size = 0x4, scoped, tag = 'scoped memory for tpu_custom_call.1']
    #allocation5 [shape = 'u8[8192]{0}', space=vmem, size = 0x2000, scoped, tag = 'output window, operand 0, single buffered']
    %6 = vsyncpa [#allocation3], 0
    %7 = vsyncpa [#allocation4], 0
    // Predicated region
    $region2: #{tpu_custom_call.1} parent=1 // pred_check
      _
    $region3: #{tpu_custom_call.1} parent=1 // pred_check_branch
      %9 = sbr.rel (0) target = $region5
    $region4: #{tpu_custom_call.1} parent=1 // pred_region
      %s11 = ssub.s32 64, 64
      %12 = vsyncadd [#allocation3], %s11
      %s14 = sshll.u32 [#allocation2], 4
      %s15 = int_to_ptr.vmem [resolvable:$true] %s14
      %17 = dma.hbm_to_vmem [thread:$0]  %s0, 64, %s15, [#allocation3]
    $region5: #{tpu_custom_call.1} parent=1 // pred_fallthru
      _
    // Predicated region
    $region6: #{tpu_custom_call.1} parent=1 // pred_check
      _
    $region7: #{tpu_custom_call.1} parent=1 // pred_check_branch
      %19 = sbr.rel (0) target = $region9
    $region8: #{tpu_custom_call.1} parent=1 // pred_region
      %20 = dma.done [#allocation3], 64
    $region9: #{tpu_custom_call.1} parent=1 // pred_fallthru
      _
    %v21 = vld [vmem:[#allocation2] sm:$0xf]
    %v22 = vunpack.c.0.s8 %v21
    %v23 = vunpack.c.1.s8 %v21
    %v24 = vand.u32 %v22, 255
    %v25 = vand.u32 %v23, 255
    %v26 = vcvt.s32.f32 %v24
    %v27 = vcvt.s32.f32 %v25
    %v28 = vmul.f32 %v26, 0.003921569
    %v29 = vmul.f32 %v27, 0.003921569
    %30 = vst [vmem:[#allocation5] sm:$0xff] %v28
    %31 = vst [vmem:[#allocation5 + $0x8] sm:$0xff] %v29
    // Predicated region
    $region10: #{tpu_custom_call.1} parent=1 // pred_check
      _
    $region11: #{tpu_custom_call.1} parent=1 // pred_check_branch
      %33 = sbr.rel (0) target = $region13
    $region12: #{tpu_custom_call.1} parent=1 // pred_region
      %s35 = ssub.s32 256, 256
      %36 = vsyncadd [#allocation4], %s35
      %s38 = sshll.u32 [#allocation5], 4
      %s39 = int_to_ptr.vmem [resolvable:$true] %s38
      %41 = dma.vmem_to_hbm [thread:$0]  %s39, 256, %s1, [#allocation4]
    $region13: #{tpu_custom_call.1} parent=1 // pred_fallthru
      _
    // Predicated region
    $region14: #{tpu_custom_call.1} parent=1 // pred_check
      _
    $region15: #{tpu_custom_call.1} parent=1 // pred_check_branch
      %43 = sbr.rel (0) target = $region17
    $region16: #{tpu_custom_call.1} parent=1 // pred_region
      %44 = dma.done [#allocation4], 256
    $region17: #{tpu_custom_call.1} parent=1 // pred_fallthru
      _
    %45 = vsyncpa [#allocation3], 1
    %46 = vsyncpa [#allocation4], 1

</llo_original>
